<compile_context>
chip_gen: v7x
topology: tpu7x:2x2x1
jax: 0.10.0
libtpu: 0.0.40
codegen_flags: <defaults>
</compile_context>

<pallas_src>
import functools

import jax
import jax.numpy as jnp
from jax.experimental import pallas as pl
from jax.experimental.pallas import tpu as pltpu


def _joints_mse_kernel(*refs, use_target_weight, tile_r, total_rows):
    """One (tile_r, HW) row block per grid step.

    Pure VPU work (sub / mul / square) plus one tile reduce whose partial sum
    lands in this step's own SMEM output slot — no cross-step accumulator, so
    the grid axis is fully parallel.
    """
    if use_target_weight:
        pred_ref, gt_ref, w_ref, out_ref = refs
    else:
        pred_ref, gt_ref, out_ref = refs

    diff = pred_ref[...].astype(jnp.float32) - gt_ref[...].astype(jnp.float32)
    if use_target_weight:
        # (tile_r, 1) broadcasts over HW; w*(pred-gt) == w*pred - w*gt.
        diff = diff * w_ref[...].astype(jnp.float32)

    if total_rows % tile_r != 0:
        # Tail tile: rows past `total_rows` hold undefined data.  Select (not
        # multiply) so garbage / NaN never reaches the sum.
        i = pl.program_id(0)
        row_ids = jax.lax.broadcasted_iota(jnp.int32, diff.shape, 0)
        valid = (i * tile_r + row_ids) < total_rows
        diff = jnp.where(valid, diff, 0.0)

    out_ref[0, 0] = jnp.sum(diff * diff)


def _vmem_budget_bytes():
    """(per-input-buffer byte budget, physical VMEM or None) per generation."""
    try:
        info = pltpu.get_tpu_info()
        vmem = getattr(info, "vmem_capacity_bytes", None)
    except Exception:  # pragma: no cover - interpret mode / non-TPU tracing
        vmem = None
    if vmem is None:
        # Conservative: 2 inputs x 2 buffers x 2 MiB = 8 MiB fits every
        # scoped-VMEM default (16 MiB on v5e) without flags.
        return 2 << 20, None
    if vmem <= (64 << 20):        # v7x-class: 64 MiB VMEM, ~3.2 TB/s HBM
        return 6 << 20, vmem      # bigger tiles amortize ~0.35 us/step grid cost
    return 4 << 20, vmem          # v5e / v6e: 128 MiB physical VMEM


def _pick_row_tile(num_rows, row_bytes, budget_bytes):
    """Largest layout-legal row tile within the per-buffer budget.

    Full extent if it fits (always legal); otherwise the biggest 8-aligned
    tile under the budget (>= 8).  No divisibility requirement — the tail is
    masked inside the kernel.
    """
    budget_rows = max(8, budget_bytes // max(1, row_bytes))
    if num_rows <= budget_rows:
        return num_rows
    return max(8, (budget_rows // 8) * 8)


def joints_mse_loss(output, target, target_weight=None, *,
                    use_target_weight=True, tile_budget_bytes=None):
    """output/target: (B, J, H, W); target_weight: (B, J, 1) (ignored when
    use_target_weight=False).  bf16 inputs stream at half the HBM bytes; the
    kernel accumulates in f32 regardless."""
    if use_target_weight and target_weight is None:
        raise ValueError("target_weight required when use_target_weight=True")

    B, J, H, W = output.shape
    R, C = B * J, H * W

    # Copy-free reshapes only — no transpose, no dtype conversion in HBM.
    pred = output.reshape(R, C)
    gt = target.reshape(R, C)

    if tile_budget_bytes is None:
        budget, vmem_capacity = _vmem_budget_bytes()
    else:
        budget, vmem_capacity = tile_budget_bytes, None

    row_bytes = C * pred.dtype.itemsize
    tile_r = _pick_row_tile(R, row_bytes, budget)
    num_tiles = pl.cdiv(R, tile_r)

    # Build operand list / specs; drop the weight path entirely when unused.
    args = [pred, gt]
    in_specs = [
        pl.BlockSpec((tile_r, C), lambda i: (i, 0)),
        pl.BlockSpec((tile_r, C), lambda i: (i, 0)),
    ]
    if use_target_weight:
        args.append(target_weight.reshape(R, 1))
        in_specs.append(pl.BlockSpec((tile_r, 1), lambda i: (i, 0)))

    # Raise the scoped-VMEM limit only when the double-buffered footprint
    # could exceed the tightest default (16 MiB on v5e); stay far below
    # physical capacity on every generation.
    compiler_kwargs = dict(dimension_semantics=("parallel",))
    if vmem_capacity is not None:
        tile_bytes = tile_r * C * pred.dtype.itemsize
        w_bytes = (((tile_r + 7) // 8) * 8) * 128 * 4 if use_target_weight else 0
        needed = 4 * tile_bytes + 2 * w_bytes + (1 << 20)
        if needed + (4 << 20) > (16 << 20):
            compiler_kwargs["vmem_limit_bytes"] = int(
                min(vmem_capacity - (8 << 20), needed + (8 << 20)))

    kernel = functools.partial(
        _joints_mse_kernel,
        use_target_weight=use_target_weight,
        tile_r=tile_r,
        total_rows=R,
    )

    partials = pl.pallas_call(
        kernel,
        out_shape=jax.ShapeDtypeStruct((num_tiles, 1), jnp.float32),
        grid_spec=pltpu.PrefetchScalarGridSpec(
            num_scalar_prefetch=0,
            grid=(num_tiles,),
            in_specs=in_specs,
            out_specs=pl.BlockSpec((1, 1), lambda i: (i, 0),
                                   memory_space=pltpu.SMEM),
        ),
        compiler_params=pltpu.CompilerParams(**compiler_kwargs),
    )(*args)

    # Tiny epilogue in plain JAX: sum of per-tile partials, one scale.
    return jnp.sum(partials) * jnp.float32(0.5 / (R * C))


def _reference_loss(output, target, target_weight, use_target_weight):
    B, J, H, W = output.shape
    pred = output.reshape(B, J, -1).astype(jnp.float32)
    gt = target.reshape(B, J, -1).astype(jnp.float32)
    loss = 0.0
    for idx in range(J):
        hp = pred[:, idx, :]
        hg = gt[:, idx, :]
        if use_target_weight:
            wj = target_weight[:, idx].astype(jnp.float32)   # (B, 1)
            hp = hp * wj
            hg = hg * wj
        loss = loss + 0.5 * jnp.mean((hp - hg) ** 2)
    return loss / J


if __name__ == "__main__":
    key = jax.random.PRNGKey(0)
    k1, k2, k3, k4, k5, k6 = jax.random.split(key, 6)

    # Small, module-consistent shapes.
    B, J, H, W = 2, 4, 16, 16
    output = jax.random.normal(k1, (B, J, H, W), dtype=jnp.float32)
    target = jax.random.normal(k2, (B, J, H, W), dtype=jnp.float32)
    target_weight = jax.random.uniform(k3, (B, J, 1), dtype=jnp.float32)

    loss = joints_mse_loss(output, target, target_weight,
                           use_target_weight=True)
    loss = jax.block_until_ready(loss)
    ref = _reference_loss(output, target, target_weight, use_target_weight=True)
    assert jnp.allclose(loss, ref, rtol=1e-5, atol=1e-6), (loss, ref)

    # No-weight path (weight operand dropped from the kernel entirely).
    loss_nw = joints_mse_loss(output, target, use_target_weight=False)
    loss_nw = jax.block_until_ready(loss_nw)
    ref_nw = _reference_loss(output, target, target_weight,
                             use_target_weight=False)
    assert jnp.allclose(loss_nw, ref_nw, rtol=1e-5, atol=1e-6), (loss_nw, ref_nw)

    # COCO-like awkward row count (J=17 -> R=34): forces a multi-tile grid
    # with a masked tail tile via a tiny test-only budget override.
    B2, J2 = 2, 17
    output2 = jax.random.normal(k4, (B2, J2, H, W), dtype=jnp.float32)
    target2 = jax.random.normal(k5, (B2, J2, H, W), dtype=jnp.float32)
    tw2 = jax.random.uniform(k6, (B2, J2, 1), dtype=jnp.float32)
    loss_t = joints_mse_loss(output2, target2, tw2, use_target_weight=True,
                             tile_budget_bytes=8 * 1024)
    loss_t = jax.block_until_ready(loss_t)
    ref_t = _reference_loss(output2, target2, tw2, use_target_weight=True)
    assert jnp.allclose(loss_t, ref_t, rtol=1e-5, atol=1e-6), (loss_t, ref_t)

    print("KERNEL_OK")
</pallas_src>

<mosaic_0001>
module attributes {stable_mosaic.version = 11 : i64} {
  func.func @_joints_mse_kernel(%arg0: i32, %arg1: memref<8x256xf32, #tpu.memory_space<vmem>>, %arg2: memref<8x256xf32, #tpu.memory_space<vmem>>, %arg3: memref<8x1xf32, #tpu.memory_space<vmem>>, %arg4: memref<1x1xf32, #tpu.memory_space<smem>>) attributes {dimension_semantics = [#tpu.dimension_semantics<parallel>], iteration_bounds = array<i64: 1>, scalar_prefetch = 0 : i64, scratch_operands = 0 : i64, tpu.core_type = #tpu.core_type<tc>, window_params = [{transform_indices = @transform_0, window_bounds = array<i64: 8, 256>}, {transform_indices = @transform_1, window_bounds = array<i64: 8, 256>}, {transform_indices = @transform_2, window_bounds = array<i64: 8, 1>}, {transform_indices = @transform_3, window_bounds = array<i64: 1, 1>}]} {
    %c0 = arith.constant 0 : index
    %c0_0 = arith.constant 0 : index
    %0 = vector.load %arg1[%c0, %c0_0] : memref<8x256xf32, #tpu.memory_space<vmem>>, vector<8x256xf32>
    %c0_1 = arith.constant 0 : index
    %c0_2 = arith.constant 0 : index
    %1 = vector.load %arg2[%c0_1, %c0_2] : memref<8x256xf32, #tpu.memory_space<vmem>>, vector<8x256xf32>
    %2 = arith.subf %0, %1 : vector<8x256xf32>
    %c0_3 = arith.constant 0 : index
    %c0_4 = arith.constant 0 : index
    %3 = vector.load %arg3[%c0_3, %c0_4] : memref<8x1xf32, #tpu.memory_space<vmem>>, vector<8x1xf32>
    %4 = vector.broadcast %3 : vector<8x1xf32> to vector<8x256xf32>
    %5 = arith.mulf %2, %4 : vector<8x256xf32>
    %6 = arith.mulf %5, %5 : vector<8x256xf32>
    %7 = vector.shape_cast %6 : vector<8x256xf32> to vector<1x8x256xf32>
    %cst = arith.constant dense<0.000000e+00> : vector<1xf32>
    %8 = vector.multi_reduction <add>, %7, %cst [1, 2] : vector<1x8x256xf32> to vector<1xf32>
    %9 = vector.shape_cast %8 : vector<1xf32> to vector<1x1x1xf32>
    %10 = vector.extract %9[0, 0, 0] : f32 from vector<1x1x1xf32>
    %c0_5 = arith.constant 0 : index
    %c0_6 = arith.constant 0 : index
    %11 = memref.load %arg4[%c0_5, %c0_6] : memref<1x1xf32, #tpu.memory_space<smem>>
    memref.store %10, %arg4[%c0_5, %c0_6] : memref<1x1xf32, #tpu.memory_space<smem>>
    return
  }
  func.func @transform_0(%arg0: i32) -> (i32, i32) {
    %c0_i32 = arith.constant 0 : i32
    %c0_i32_0 = arith.constant 0 : i32
    return %arg0, %c0_i32 : i32, i32
  }
  func.func @transform_1(%arg0: i32) -> (i32, i32) {
    %c0_i32 = arith.constant 0 : i32
    %c0_i32_0 = arith.constant 0 : i32
    return %arg0, %c0_i32 : i32, i32
  }
  func.func @transform_2(%arg0: i32) -> (i32, i32) {
    %c0_i32 = arith.constant 0 : i32
    %c0_i32_0 = arith.constant 0 : i32
    return %arg0, %c0_i32 : i32, i32
  }
  func.func @transform_3(%arg0: i32) -> (i32, i32) {
    %c0_i32 = arith.constant 0 : i32
    %c0_i32_0 = arith.constant 0 : i32
    return %arg0, %c0_i32 : i32, i32
  }
}

</mosaic_0001>

<llo_original>
// kernel: tpu_custom_call.1
$region0: #{tpu_custom_call.1}
  #allocation0 [shape = 'u32[]', space=smem, size = 0x4, offset = 0x4, fixed_abs, tag = 'smem constant byte address 0x4 - core index']
  #allocation1 [shape = 'u32[144,128]{1,0:T(1,128)}', space=vmem, size = 0x12000, scoped, tag = 'internal scratch']
  %s0 = inlined_call_operand.hbm [shape: f32[8,256], index: 0, kind: input, shape index: {}]
  %s1 = inlined_call_operand.hbm [shape: f32[8,256], index: 1, kind: input, shape index: {}]
  %s2 = inlined_call_operand.vmem [shape: f32[8,1], index: 2, kind: input, shape index: {}]
  %s3 = inlined_call_operand.hbm [shape: f32[1,1], index: 3, kind: output, shape index: {}]
  %s4 = sld [smem:[#allocation0]]
  $region30: #{tpu_custom_call.1} parent=0
    _
  %s6 = ssub.s32 1, %s4
  %s7 = scalar_select 0, %s6, %s4
  $region1: #{tpu_custom_call.1} parent=0
    #allocation2 [shape = 'u8[8192]{0}', space=vmem, size = 0x2000, scoped, tag = 'input window, operand 0, single buffered']
    #allocation3 [shape = 's32[1]{0}', space=sflag, size = 0x4, scoped, tag = 'scoped memory for tpu_custom_call.1']
    #allocation4 [shape = 's32[1]{0}', space=sflag, size = 0x4, scoped, tag = 'scoped memory for tpu_custom_call.1']
    #allocation5 [shape = 'u8[8192]{0}', space=vmem, size = 0x2000, scoped, tag = 'input window, operand 1, single buffered']
    #allocation6 [shape = 's32[1]{0}', space=sflag, size = 0x4, scoped, tag = 'scoped memory for tpu_custom_call.1']
    #allocation7 [shape = 'u8[512]{0}', space=smem, size = 0x200, scoped, tag = 'output window, operand 0, single buffered']
    %8 = vsyncpa [#allocation3], 0
    %9 = vsyncpa [#allocation6], 0
    %10 = vsyncpa [#allocation4], 0
    // Predicated region
    $region2: #{tpu_custom_call.1} parent=1 // pred_check
      _
    $region3: #{tpu_custom_call.1} parent=1 // pred_check_branch
      %12 = sbr.rel (0) target = $region5
    $region4: #{tpu_custom_call.1} parent=1 // pred_region
      %s14 = ssub.s32 256, 256
      %15 = vsyncadd [#allocation3], %s14
      %s17 = sshll.u32 [#allocation2], 4
      %s18 = int_to_ptr.vmem [resolvable:$true] %s17
      %20 = dma.hbm_to_vmem [thread:$0]  %s0, 256, %s18, [#allocation3]
    $region5: #{tpu_custom_call.1} parent=1 // pred_fallthru
      _
    // Predicated region
    $region6: #{tpu_custom_call.1} parent=1 // pred_check
      _
    $region7: #{tpu_custom_call.1} parent=1 // pred_check_branch
      %22 = sbr.rel (0) target = $region9
    $region8: #{tpu_custom_call.1} parent=1 // pred_region
      %s24 = ssub.s32 256, 256
      %25 = vsyncadd [#allocation6], %s24
      %s27 = sshll.u32 [#allocation5], 4
      %s28 = int_to_ptr.vmem [resolvable:$true] %s27
      %30 = dma.hbm_to_vmem [thread:$0]  %s1, 256, %s28, [#allocation6]
    $region9: #{tpu_custom_call.1} parent=1 // pred_fallthru
      _
    // Predicated region
    $region10: #{tpu_custom_call.1} parent=1 // pred_check
      _
    $region11: #{tpu_custom_call.1} parent=1 // pred_check_branch
      %32 = sbr.rel (0) target = $region13
    $region12: #{tpu_custom_call.1} parent=1 // pred_region
      _
    $region13: #{tpu_custom_call.1} parent=1 // pred_fallthru
      _
    // Predicated region
    $region14: #{tpu_custom_call.1} parent=1 // pred_check
      _
    $region15: #{tpu_custom_call.1} parent=1 // pred_check_branch
      %34 = sbr.rel (0) target = $region17
    $region16: #{tpu_custom_call.1} parent=1 // pred_region
      %35 = dma.done [#allocation3], 256
    $region17: #{tpu_custom_call.1} parent=1 // pred_fallthru
      _
    // Predicated region
    $region18: #{tpu_custom_call.1} parent=1 // pred_check
      _
    $region19: #{tpu_custom_call.1} parent=1 // pred_check_branch
      %37 = sbr.rel (0) target = $region21
    $region20: #{tpu_custom_call.1} parent=1 // pred_region
      %38 = dma.done [#allocation6], 256
    $region21: #{tpu_custom_call.1} parent=1 // pred_fallthru
      _
    %v39 = vld [vmem:[#allocation2] sm:$0xff]
    %v40 = vld [vmem:[#allocation2 + $0x8] sm:$0xff]
    %v41 = vld [vmem:[#allocation5] sm:$0xff]
    %v42 = vld [vmem:[#allocation5 + $0x8] sm:$0xff]
    %v43 = vsub.f32 %v39, %v41
    %v44 = vsub.f32 %v40, %v42
    %v45 = vld [vmem:[%s2] sm:$0xff]
    %47 = vset.pattern.permute.xlu0 0
    %48 = vperm.xlu0 %47, %v45
    %v49 = vpop.permute.xlu0 %48
    %v51 = vmul.f32 %v43, %v49
    %v52 = vmul.f32 %v44, %v49
    %v53 = vmul.f32 %v51, %v51
    %v54 = vmul.f32 %v52, %v52
    %v55 = vadd.f32 %v53, %v54
    %56 = vadd.xlane.f32.xlu0 %v55
    %v57 = vpop.xlane.xlu0 %56
    %v58 = vrot.slane %v57, 4
    %v59 = vadd.f32 %v57, %v58
    %v60 = vrot.slane %v59, 2
    %v61 = vadd.f32 %v59, %v60
    %v62 = vrot.slane %v61, 1
    %v63 = vadd.f32 %v61, %v62
    %s64 = vtos %v63
    %s65 = scalar_lea.smem [#allocation7], 0
    %66 = sst [smem:[%s65]] %s64
    // Predicated region
    $region22: #{tpu_custom_call.1} parent=1 // pred_check
      _
    $region23: #{tpu_custom_call.1} parent=1 // pred_check_branch
      %68 = sbr.rel (0) target = $region25
    $region24: #{tpu_custom_call.1} parent=1 // pred_region
      %s70 = ssub.s32 16, 16
      %71 = vsyncadd [#allocation4], %s70
      %74 = dma.smem_to_hbm [#allocation7], 16, %s3, [#allocation4]
    $region25: #{tpu_custom_call.1} parent=1 // pred_fallthru
      _
    // Predicated region
    $region26: #{tpu_custom_call.1} parent=1 // pred_check
      _
    $region27: #{tpu_custom_call.1} parent=1 // pred_check_branch
      %76 = sbr.rel (0) target = $region29
    $region28: #{tpu_custom_call.1} parent=1 // pred_region
      %77 = dma.done [#allocation4], 16
    $region29: #{tpu_custom_call.1} parent=1 // pred_fallthru
      _
    %78 = sfence
    %79 = vsyncpa [#allocation3], 1
    %80 = vsyncpa [#allocation6], 1
    %81 = vsyncpa [#allocation4], 1

</llo_original>
